<compile_context>
chip_gen: v5e
topology: v5e:2x2
jax: 0.10.0
libtpu: 0.0.40
codegen_flags: <defaults>
</compile_context>

<pallas_src>
import jax
import jax.numpy as jnp
from jax import lax
from jax.experimental import pallas as pl
from jax.experimental.pallas import tpu as pltpu


def _conv_im2col_kernel(p_ref, w_ref, b_ref, o_ref):
    """NB batch elements per grid step.

    p_ref: (NB, K, HWp)   im2col patch matrices for this batch tile (VMEM)
    w_ref: (C2, K)        flattened conv weights (constant index_map -> resident)
    b_ref: (C2, 1)        conv bias
    o_ref: (NB, C2, HWp)  conv output, lane-dense (HWp is a multiple of 128)
    """
    w = w_ref[...]
    b = b_ref[...].astype(jnp.float32)
    nb = o_ref.shape[0]
    # Static unrolled loop over the (small) per-step batch tile: one fused MXU matmul
    # per element, no in-kernel transposes, lane-dense (C2, HWp) stores.
    for i in range(nb):
        acc = jnp.dot(w, p_ref[i], preferred_element_type=jnp.float32) + b
        o_ref[i] = acc.astype(o_ref.dtype)


def _largest_divisor_leq(n, cap):
    for d in range(max(1, min(n, cap)), 0, -1):
        if n % d == 0:
            return d
    return 1


def subpixel_conv(x_nchw, weight_oihw, bias, *, upscale_factor=1, padding=1):
    """Matches torch: PixelShuffle(r)(Conv2d(Cin, Cout*r^2, 3, stride=1, padding=1)(x))."""
    N, Cin, H, W = x_nchw.shape
    C2, Cin_w, KH, KW = weight_oihw.shape
    assert Cin_w == Cin
    r = upscale_factor
    assert C2 % (r * r) == 0

    Ho = H + 2 * padding - KH + 1
    Wo = W + 2 * padding - KW + 1
    HW = Ho * Wo
    HWp = ((HW + 127) // 128) * 128          # lane-dense output stores
    K = Cin * KH * KW

    # im2col (once, wrapper-side). K-index order is (c, ky, kx), i.e. exactly the order
    # of weight_oihw.reshape(C2, K):
    #   patches[n, c*KH*KW + ky*KW + kx, h*Wo + w] = x_pad[n, c, h + ky, w + kx]
    xp = jnp.pad(x_nchw, ((0, 0), (0, 0), (padding, padding), (padding, padding)))
    taps = [xp[:, :, ky:ky + Ho, kx:kx + Wo].reshape(N, Cin, HW)
            for ky in range(KH) for kx in range(KW)]
    patches = jnp.stack(taps, axis=2).reshape(N, K, HW)
    if HWp != HW:
        patches = jnp.pad(patches, ((0, 0), (0, 0), (0, HWp - HW)))

    w_mat = weight_oihw.reshape(C2, K).astype(jnp.float32)
    b_col = bias.reshape(C2, 1).astype(jnp.float32)

    # Batch tile: amortize per-grid-step overhead, but keep double-buffered (in + out)
    # blocks comfortably inside the default scoped-VMEM budget.
    per_elem_bytes = (K + C2) * HWp * 4 * 2   # in + out blocks, double-buffered
    nb_cap = max(1, (8 << 20) // max(per_elem_bytes, 1))
    NB = _largest_divisor_leq(N, min(nb_cap, 8))

    # TODO(synk): for production-sized H/W/Cin, additionally tile HWp into lane bands
    # (and set vmem_limit_bytes) instead of a whole-image block per batch element.
    conv_flat = pl.pallas_call(
        _conv_im2col_kernel,
        out_shape=jax.ShapeDtypeStruct((N, C2, HWp), x_nchw.dtype),
        grid=(N // NB,),
        in_specs=[
            pl.BlockSpec((NB, K, HWp), lambda n: (n, 0, 0)),
            pl.BlockSpec((C2, K), lambda n: (0, 0)),
            pl.BlockSpec((C2, 1), lambda n: (0, 0)),
        ],
        out_specs=pl.BlockSpec((NB, C2, HWp), lambda n: (n, 0, 0)),
        compiler_params=pltpu.CompilerParams(dimension_semantics=("parallel",)),
    )(patches, w_mat, b_col)

    y = conv_flat[:, :, :HW].reshape(N, C2, Ho, Wo)   # already NCHW-ordered

    # PixelShuffle (depth-to-space) is a pure layout permute; identity for r == 1.
    if r > 1:
        out_ch = C2 // (r * r)
        y = y.reshape(N, out_ch, r, r, Ho, Wo)
        y = jnp.transpose(y, (0, 1, 4, 2, 5, 3))
        y = y.reshape(N, out_ch, Ho * r, Wo * r)
    return y


def _reference(x_nchw, weight_oihw, bias, *, upscale_factor=1, padding=1):
    y = lax.conv_general_dilated(
        x_nchw, weight_oihw,
        window_strides=(1, 1),
        padding=((padding, padding), (padding, padding)),
        dimension_numbers=("NCHW", "OIHW", "NCHW"),
    )
    y = y + bias[None, :, None, None]
    r = upscale_factor
    if r > 1:
        N, C2, Hc, Wc = y.shape
        C = C2 // (r * r)
        y = y.reshape(N, C, r, r, Hc, Wc).transpose(0, 1, 4, 2, 5, 3)
        y = y.reshape(N, C, Hc * r, Wc * r)
    return y


if __name__ == "__main__":
    key = jax.random.PRNGKey(0)
    N, Cin, H, W = 2, 4, 16, 16
    KH = KW = 3

    # Two configs: the module default (upscale_factor=1, identity shuffle) and r=2.
    for out_ch, r in [(8, 1), (8, 2)]:
        C2 = out_ch * r * r
        kx, kw, kb, key = jax.random.split(key, 4)
        x = jax.random.normal(kx, (N, Cin, H, W), dtype=jnp.float32)
        fan_in = Cin * KH * KW
        bound = 1.0 / (fan_in ** 0.5)
        weight = jax.random.uniform(kw, (C2, Cin, KH, KW), jnp.float32, -bound, bound)
        bias = jax.random.uniform(kb, (C2,), jnp.float32, -bound, bound)

        out = subpixel_conv(x, weight, bias, upscale_factor=r)
        out = jax.block_until_ready(out)
        ref = _reference(x, weight, bias, upscale_factor=r)

        assert out.shape == (N, out_ch, H * r, W * r), (out.shape, (N, out_ch, H * r, W * r))
        assert jnp.allclose(out, ref, rtol=1e-4, atol=1e-4), \
            f"mismatch vs reference (out_ch={out_ch}, upscale_factor={r})"

    print("KERNEL_OK")
</pallas_src>

<mosaic_0001>
module attributes {stable_mosaic.version = 11 : i64} {
  func.func @_conv_im2col_kernel(%arg0: i32, %arg1: memref<2x36x256xf32, #tpu.memory_space<vmem>>, %arg2: memref<8x36xf32, #tpu.memory_space<vmem>>, %arg3: memref<8x1xf32, #tpu.memory_space<vmem>>, %arg4: memref<2x8x256xf32, #tpu.memory_space<vmem>>) attributes {dimension_semantics = [#tpu.dimension_semantics<parallel>], iteration_bounds = array<i64: 1>, scalar_prefetch = 0 : i64, scratch_operands = 0 : i64, tpu.core_type = #tpu.core_type<tc>, window_params = [{transform_indices = @transform_0, window_bounds = array<i64: 2, 36, 256>}, {pipeline_mode = #tpu.pipeline_mode<synchronous>, transform_indices = @transform_1, window_bounds = array<i64: 8, 36>}, {pipeline_mode = #tpu.pipeline_mode<synchronous>, transform_indices = @transform_2, window_bounds = array<i64: 8, 1>}, {transform_indices = @transform_3, window_bounds = array<i64: 2, 8, 256>}]} {
    %c0 = arith.constant 0 : index
    %c0_0 = arith.constant 0 : index
    %0 = vector.load %arg2[%c0, %c0_0] : memref<8x36xf32, #tpu.memory_space<vmem>>, vector<8x36xf32>
    %c0_1 = arith.constant 0 : index
    %c0_2 = arith.constant 0 : index
    %1 = vector.load %arg3[%c0_1, %c0_2] : memref<8x1xf32, #tpu.memory_space<vmem>>, vector<8x1xf32>
    %c0_3 = arith.constant 0 : index
    %c0_4 = arith.constant 0 : index
    %c0_5 = arith.constant 0 : index
    %2 = vector.load %arg1[%c0_3, %c0_4, %c0_5] : memref<2x36x256xf32, #tpu.memory_space<vmem>>, vector<1x36x256xf32>
    %3 = vector.shape_cast %2 : vector<1x36x256xf32> to vector<36x256xf32>
    %cst = arith.constant dense<0.000000e+00> : vector<8x256xf32>
    %4 = tpu.matmul %0, %3, %cst {dimension_numbers = #tpu.dot_dimension_numbers<[1], [0], [0], [1], [0, 0, 1, 1], [], []>} : vector<8x36xf32>, vector<36x256xf32>, vector<8x256xf32> -> vector<8x256xf32>
    %5 = vector.broadcast %1 : vector<8x1xf32> to vector<8x256xf32>
    %6 = arith.addf %4, %5 : vector<8x256xf32>
    %c0_6 = arith.constant 0 : index
    %c0_7 = arith.constant 0 : index
    %c0_8 = arith.constant 0 : index
    %7 = vector.load %arg4[%c0_6, %c0_7, %c0_8] : memref<2x8x256xf32, #tpu.memory_space<vmem>>, vector<1x8x256xf32>
    %8 = vector.shape_cast %7 : vector<1x8x256xf32> to vector<8x256xf32>
    %9 = vector.shape_cast %6 : vector<8x256xf32> to vector<1x8x256xf32>
    tpu.vector_store %arg4[%c0_6, %c0_7, %c0_8], %9 {strides = array<i32>} : memref<2x8x256xf32, #tpu.memory_space<vmem>>, vector<1x8x256xf32>,
    %c1 = arith.constant 1 : index
    %c0_9 = arith.constant 0 : index
    %c0_10 = arith.constant 0 : index
    %10 = vector.load %arg1[%c1, %c0_9, %c0_10] : memref<2x36x256xf32, #tpu.memory_space<vmem>>, vector<1x36x256xf32>
    %11 = vector.shape_cast %10 : vector<1x36x256xf32> to vector<36x256xf32>
    %cst_11 = arith.constant dense<0.000000e+00> : vector<8x256xf32>
    %12 = tpu.matmul %0, %11, %cst_11 {dimension_numbers = #tpu.dot_dimension_numbers<[1], [0], [0], [1], [0, 0, 1, 1], [], []>} : vector<8x36xf32>, vector<36x256xf32>, vector<8x256xf32> -> vector<8x256xf32>
    %13 = vector.broadcast %1 : vector<8x1xf32> to vector<8x256xf32>
    %14 = arith.addf %12, %13 : vector<8x256xf32>
    %c1_12 = arith.constant 1 : index
    %c0_13 = arith.constant 0 : index
    %c0_14 = arith.constant 0 : index
    %15 = vector.load %arg4[%c1_12, %c0_13, %c0_14] : memref<2x8x256xf32, #tpu.memory_space<vmem>>, vector<1x8x256xf32>
    %16 = vector.shape_cast %15 : vector<1x8x256xf32> to vector<8x256xf32>
    %17 = vector.shape_cast %14 : vector<8x256xf32> to vector<1x8x256xf32>
    tpu.vector_store %arg4[%c1_12, %c0_13, %c0_14], %17 {strides = array<i32>} : memref<2x8x256xf32, #tpu.memory_space<vmem>>, vector<1x8x256xf32>,
    return
  }
  func.func @transform_0(%arg0: i32) -> (i32, i32, i32) {
    %c0_i32 = arith.constant 0 : i32
    %c0_i32_0 = arith.constant 0 : i32
    %c0_i32_1 = arith.constant 0 : i32
    return %arg0, %c0_i32, %c0_i32_0 : i32, i32, i32
  }
  func.func @transform_1(%arg0: i32) -> (i32, i32) {
    %c0_i32 = arith.constant 0 : i32
    %c0_i32_0 = arith.constant 0 : i32
    %c0_i32_1 = arith.constant 0 : i32
    return %c0_i32, %c0_i32_0 : i32, i32
  }
  func.func @transform_2(%arg0: i32) -> (i32, i32) {
    %c0_i32 = arith.constant 0 : i32
    %c0_i32_0 = arith.constant 0 : i32
    %c0_i32_1 = arith.constant 0 : i32
    return %c0_i32, %c0_i32_0 : i32, i32
  }
  func.func @transform_3(%arg0: i32) -> (i32, i32, i32) {
    %c0_i32 = arith.constant 0 : i32
    %c0_i32_0 = arith.constant 0 : i32
    %c0_i32_1 = arith.constant 0 : i32
    return %arg0, %c0_i32, %c0_i32_0 : i32, i32, i32
  }
}

</mosaic_0001>

<llo_original>
// kernel: tpu_custom_call.1
$region0: #{tpu_custom_call.1}
  #allocation0 [shape = 'u32[]', space=smem, size = 0x4, offset = 0x4, fixed_abs, tag = 'smem constant byte address 0x4 - core index']
  #allocation1 [shape = 'u32[72,128]{1,0:T(1,128)}', space=vmem, size = 0x9000, scoped, tag = 'internal scratch']
  %s0 = inlined_call_operand.vmem [shape: f32[2,36,256], index: 0, kind: input, shape index: {}]
  %s1 = inlined_call_operand.vmem [shape: f32[8,36], index: 1, kind: input, shape index: {}]
  %s2 = inlined_call_operand.vmem [shape: f32[8,1], index: 2, kind: input, shape index: {}]
  %s3 = inlined_call_operand.hbm [shape: f32[2,8,256], index: 3, kind: output, shape index: {}]
  %s4 = sld [smem:[#allocation0]]
  $region22: #{tpu_custom_call.1} parent=0
    _
  %s6 = ssub.s32 1, %s4
  %s7 = scalar_select 0, %s6, %s4
  $region1: #{tpu_custom_call.1} parent=0
    #allocation2 [shape = 'u8[16384]{0}', space=vmem, size = 0x4000, scoped, tag = 'output window, operand 0, single buffered']
    #allocation3 [shape = 's32[1]{0}', space=sflag, size = 0x4, scoped, tag = 'scoped memory for tpu_custom_call.1']
    %8 = vsyncpa [#allocation3], 0
    // Predicated region
    $region2: #{tpu_custom_call.1} parent=1 // pred_check
      _
    $region3: #{tpu_custom_call.1} parent=1 // pred_check_branch
      %10 = sbr.rel (0) target = $region5
    $region4: #{tpu_custom_call.1} parent=1 // pred_region
      _
    $region5: #{tpu_custom_call.1} parent=1 // pred_fallthru
      _
    // Predicated region
    $region6: #{tpu_custom_call.1} parent=1 // pred_check
      _
    $region7: #{tpu_custom_call.1} parent=1 // pred_check_branch
      %12 = sbr.rel (0) target = $region9
    $region8: #{tpu_custom_call.1} parent=1 // pred_region
      _
    $region9: #{tpu_custom_call.1} parent=1 // pred_fallthru
      _
    // Predicated region
    $region10: #{tpu_custom_call.1} parent=1 // pred_check
      _
    $region11: #{tpu_custom_call.1} parent=1 // pred_check_branch
      %14 = sbr.rel (0) target = $region13
    $region12: #{tpu_custom_call.1} parent=1 // pred_region
      _
    $region13: #{tpu_custom_call.1} parent=1 // pred_fallthru
      _
    %v15 = vld [vmem:[%s1] sm:$0xff]
    %v16 = vld [vmem:[%s2] sm:$0xff]
    %v17 = vld [vmem:[%s0] sm:$0xff]
    %v18 = vld [vmem:[%s0 + $0x8] sm:$0xff]
    %v19 = vld [vmem:[%s0 + $0x10] sm:$0xff]
    %v20 = vld [vmem:[%s0 + $0x18] sm:$0xff]
    %v21 = vld [vmem:[%s0 + $0x20] sm:$0xff]
    %v22 = vld [vmem:[%s0 + $0x28] sm:$0xff]
    %v23 = vld [vmem:[%s0 + $0x30] sm:$0xff]
    %v24 = vld [vmem:[%s0 + $0x38] sm:$0xff]
    %v25 = vld [vmem:[%s0 + $0x40] sm:$0xf]
    %v26 = vld [vmem:[%s0 + $0x48] sm:$0xf]
    %28 = vset.pattern.permute.xlu0 0
    %29 = vperm.xlu0 %28, %v16
    %v30 = vpop.permute.xlu0 %29
    %vm32 = vcmask 293888
    %v34 = vsel %vm32, %v15, 0
    %vm36 = vcmask 1043456
    %v38 = vsel %vm36, %v25, 0
    %v41 = vsel %vm36, %v26, 0
    %43 = vmatpush.msra.mxu0 0.0
    %44 = vmatpush.msra.mxu0 0.0
    %45 = vmatpush.msra.mxu0 0.0
    %46 = vmatpush.msra.mxu0 0.0
    %47 = vmatpush.msra.mxu0 0.0
    %48 = vmatpush.msra.mxu0 0.0
    %49 = vmatpush.msra.mxu0 0.0
    %50 = vmatpush.msra.mxu0 0.0
    %51 = vmatpush.msra.mxu0 0.0
    %52 = vmatpush.msra.mxu0 0.0
    %53 = vmatpush.msra.mxu0 0.0
    %54 = vmatpush.msra.mxu0 %v38
    %55 = vmatpush.msra.mxu0 %v23
    %56 = vmatpush.msra.mxu0 %v21
    %57 = vmatpush.msra.mxu0 %v19
    %58 = vmatpush.msra.mxu0 %v17
    %59 = vmatmul.f32.gmra.mxu0 %v34
    %v60 = vpop.f32.mrf.mxu0
    %v61 = vadd.f32 %v30, %v60
    %62 = vdwg.mxu0
    %63 = vmatpush.msra.mxu0 0.0
    %64 = vmatpush.msra.mxu0 0.0
    %65 = vmatpush.msra.mxu0 0.0
    %66 = vmatpush.msra.mxu0 0.0
    %67 = vmatpush.msra.mxu0 0.0
    %68 = vmatpush.msra.mxu0 0.0
    %69 = vmatpush.msra.mxu0 0.0
    %70 = vmatpush.msra.mxu0 0.0
    %71 = vmatpush.msra.mxu0 0.0
    %72 = vmatpush.msra.mxu0 0.0
    %73 = vmatpush.msra.mxu0 0.0
    %74 = vmatpush.msra.mxu0 %v41
    %75 = vmatpush.msra.mxu0 %v24
    %76 = vmatpush.msra.mxu0 %v22
    %77 = vmatpush.msra.mxu0 %v20
    %78 = vmatpush.msra.mxu0 %v18
    %79 = vmatmul.f32.gmra.mxu0 %v34
    %v80 = vpop.f32.mrf.mxu0
    %v81 = vadd.f32 %v30, %v80
    %82 = vdwg.mxu0
    %83 = vst [vmem:[#allocation2] sm:$0xff] %v61
    %84 = vst [vmem:[#allocation2 + $0x8] sm:$0xff] %v81
    %s85 = scalar_lea.vmem %s0, 80
    %v86 = vld [vmem:[%s85] sm:$0xff]
    %v87 = vld [vmem:[%s85 + $0x8] sm:$0xff]
    %v88 = vld [vmem:[%s85 + $0x10] sm:$0xff]
    %v89 = vld [vmem:[%s85 + $0x18] sm:$0xff]
    %v90 = vld [vmem:[%s85 + $0x20] sm:$0xff]
    %v91 = vld [vmem:[%s85 + $0x28] sm:$0xff]
    %v92 = vld [vmem:[%s85 + $0x30] sm:$0xff]
    %v93 = vld [vmem:[%s85 + $0x38] sm:$0xff]
    %v94 = vld [vmem:[%s85 + $0x40] sm:$0xf]
    %v95 = vld [vmem:[%s85 + $0x48] sm:$0xf]
    %v97 = vsel %vm36, %v94, 0
    %v100 = vsel %vm36, %v95, 0
    %102 = vmatpush.msra.mxu0 0.0
    %103 = vmatpush.msra.mxu0 0.0
    %104 = vmatpush.msra.mxu0 0.0
    %105 = vmatpush.msra.mxu0 0.0
    %106 = vmatpush.msra.mxu0 0.0
    %107 = vmatpush.msra.mxu0 0.0
    %108 = vmatpush.msra.mxu0 0.0
    %109 = vmatpush.msra.mxu0 0.0
    %110 = vmatpush.msra.mxu0 0.0
    %111 = vmatpush.msra.mxu0 0.0
    %112 = vmatpush.msra.mxu0 0.0
    %113 = vmatpush.msra.mxu0 %v97
    %114 = vmatpush.msra.mxu0 %v92
    %115 = vmatpush.msra.mxu0 %v90
    %116 = vmatpush.msra.mxu0 %v88
    %117 = vmatpush.msra.mxu0 %v86
    %118 = vmatmul.f32.gmra.mxu0 %v34
    %v119 = vpop.f32.mrf.mxu0
    %v120 = vadd.f32 %v30, %v119
    %121 = vdwg.mxu0
    %122 = vmatpush.msra.mxu0 0.0
    %123 = vmatpush.msra.mxu0 0.0
    %124 = vmatpush.msra.mxu0 0.0
    %125 = vmatpush.msra.mxu0 0.0
    %126 = vmatpush.msra.mxu0 0.0
    %127 = vmatpush.msra.mxu0 0.0
    %128 = vmatpush.msra.mxu0 0.0
    %129 = vmatpush.msra.mxu0 0.0
    %130 = vmatpush.msra.mxu0 0.0
    %131 = vmatpush.msra.mxu0 0.0
    %132 = vmatpush.msra.mxu0 0.0
    %133 = vmatpush.msra.mxu0 %v100
    %134 = vmatpush.msra.mxu0 %v93
    %135 = vmatpush.msra.mxu0 %v91
    %136 = vmatpush.msra.mxu0 %v89
    %137 = vmatpush.msra.mxu0 %v87
    %138 = vmatmul.f32.gmra.mxu0 %v34
    %v139 = vpop.f32.mrf.mxu0
    %v140 = vadd.f32 %v30, %v139
    %141 = vdwg.mxu0
    %s142 = scalar_lea.vmem [#allocation2], 16
    %143 = vst [vmem:[%s142] sm:$0xff] %v120
    %144 = vst [vmem:[%s142 + $0x8] sm:$0xff] %v140
    // Predicated region
    $region14: #{tpu_custom_call.1} parent=1 // pred_check
      _
    $region15: #{tpu_custom_call.1} parent=1 // pred_check_branch
      %146 = sbr.rel (0) target = $region17
    $region16: #{tpu_custom_call.1} parent=1 // pred_region
      %148 = vsyncadd [#allocation3], 0
      %s149 = sshll.u32 [#allocation2], 4
      %s150 = int_to_ptr.vmem [resolvable:$true] %s149
      %s151 = sshll.u32 %s3, 4
      %s152 = int_to_ptr.hbm [resolvable:$true] %s151
      %157 = dma.vmem_to_hbm [thread:$0]  %s150, 512, %s152, [#allocation3], 256, 256, 16
    $region17: #{tpu_custom_call.1} parent=1 // pred_fallthru
      _
    // Predicated region
    $region18: #{tpu_custom_call.1} parent=1 // pred_check
      _
    $region19: #{tpu_custom_call.1} parent=1 // pred_check_branch
      %159 = sbr.rel (0) target = $region21
    $region20: #{tpu_custom_call.1} parent=1 // pred_region
      %161 = dma.done [#allocation3], 512
    $region21: #{tpu_custom_call.1} parent=1 // pred_fallthru
      _
    %162 = vsyncpa [#allocation3], 1

</llo_original>
